<compile_context>
chip_gen: v6e
topology: v6e:2x2x1
jax: 0.10.0
libtpu: 0.0.40
codegen_flags: <defaults>
</compile_context>

<pallas_src>
import functools
import math

import jax
import jax.numpy as jnp
from jax import lax
from jax.experimental import pallas as pl
from jax.experimental.pallas import tpu as pltpu

_BN_EPS = 1e-5
_BIG = 3.0e38  # finite +/- sentinel for masked max/min (avoids inf*0 -> NaN)


def _vmem_capacity_bytes():
    try:
        info = pltpu.get_tpu_info()
        cap = getattr(info, "vmem_capacity_bytes", None)
        if cap:
            return int(cap)
    except Exception:
        pass
    return 64 * 1024 * 1024  # conservative default: fits v7x (64 MiB / TC)


_VMEM_CAP = _vmem_capacity_bytes()
_VMEM_LIMIT = int(_VMEM_CAP * 3 // 4)      # leave headroom for compiler scratch
_TILE_BUDGET = _VMEM_LIMIT // 2


def _round_up(x, m):
    return ((x + m - 1) // m) * m


def _row_target(cin, cout):
    # rough bytes/row: bf16 in/out double-buffered + f32 z temp + bf16 temps
    per_row = 6 * (cin + cout) + 4 * cout + 2 * cin
    if cout <= 256:
        cap = 4096                                   # mem-bound narrow layers
    else:
        cap = 2048 if _VMEM_CAP >= (96 << 20) else 1024   # v5e/v6e vs v7x
    return int(max(8, min(cap, _TILE_BUDGET // max(per_row, 1))))


class _TilePlan:
    """One padded point length / point split shared by all point-wise kernels."""

    def __init__(self, n):
        self.n = n
        # 2-way point split keeps both v7x TensorCores busy even at B = 1.
        self.nsplit = 2 if n >= 1024 else 1
        if self.nsplit == 1:
            self.half = max(_round_up(n, 8), 128)
        else:
            self.half = _round_up(pl.cdiv(n, 2), 128)
        self.n_pad = self.nsplit * self.half
        self.masked = self.n_pad != n

    def tile(self, cin, cout):
        """Largest multiple-of-8 divisor of the per-half length <= VMEM target."""
        target = _row_target(cin, cout)
        best = 8
        for d in range(8, self.half + 1, 8):
            if self.half % d == 0 and d <= target and d > best:
                best = d
        return best


# --------------------------------------------------------------------------
# Kernels
# --------------------------------------------------------------------------
def conv_stats_kernel(x_ref, aff_ref, w_ref, z_ref, sum_ref, sq_ref,
                      *, pre_relu, masked, n_real, tn, nb):
    """z = act(scale*x + shift) @ W for one (batch, half, point-tile); accumulate
    per-(batch,half) channel sum / sum-of-squares of z for the next BatchNorm."""
    @pl.when(pl.program_id(2) == 0)
    def _init():
        sum_ref[...] = jnp.zeros_like(sum_ref)
        sq_ref[...] = jnp.zeros_like(sq_ref)

    aff = aff_ref[...]                              # (2, Cin) bf16
    x = x_ref[0] * aff[0:1] + aff[1:2]              # fused prev-layer BN, bf16 VALU
    if pre_relu:
        x = jnp.maximum(x, 0.0)
    if masked:
        row = ((pl.program_id(1) * nb + pl.program_id(2)) * tn
               + lax.broadcasted_iota(jnp.int32, (tn, 1), 0))
        x = jnp.where(row < n_real, x, jnp.zeros_like(x))   # padded rows -> 0
    z = jnp.dot(x, w_ref[0], preferred_element_type=jnp.float32)   # (TN, Cout) f32
    z_ref[0] = z.astype(z_ref.dtype)
    sum_ref[0] += jnp.sum(z, axis=0, keepdims=True)
    sq_ref[0] += jnp.sum(z * z, axis=0, keepdims=True)


def conv_reduce_kernel(x_ref, aff_ref, w_ref, cs_ref, g_ref, mx_ref, mn_ref,
                       *, pre_relu, masked, n_real, tn, nb):
    """Last conv of a chain (128 -> 1024) fused with BN stats + max-pool.
    Only per-(batch,half,channel) reductions leave VMEM.  BN sum/sumsq are
    carried on the narrow input side (column-sum of x and Gram x^T x), so no
    VPU elementwise pass touches the wide (TN, 1024) z except max/min."""
    @pl.when(pl.program_id(2) == 0)
    def _init():
        cs_ref[...] = jnp.zeros_like(cs_ref)
        g_ref[...] = jnp.zeros_like(g_ref)
        mx_ref[...] = jnp.full_like(mx_ref, -_BIG)
        mn_ref[...] = jnp.full_like(mn_ref, _BIG)

    aff = aff_ref[...]
    x = x_ref[0] * aff[0:1] + aff[1:2]
    if pre_relu:
        x = jnp.maximum(x, 0.0)
    if masked:
        row = ((pl.program_id(1) * nb + pl.program_id(2)) * tn
               + lax.broadcasted_iota(jnp.int32, (tn, 1), 0))
        valid = row < n_real
        x = jnp.where(valid, x, jnp.zeros_like(x))

    z = jnp.dot(x, w_ref[0], preferred_element_type=jnp.float32)   # (TN, 1024)

    # sum_z = colsum(x) @ W ; sumsq_z = diag(W^T (x^T x) W)  -> finalized in JAX.
    xf = x.astype(jnp.float32)
    cs_ref[0] += jnp.sum(xf, axis=0, keepdims=True)                # (1, Cin)
    xt = jnp.transpose(xf).astype(x.dtype)                         # (Cin, TN) bf16
    g_ref[0] += jnp.dot(xt, x, preferred_element_type=jnp.float32) # (Cin, Cin)

    if masked:
        zmx = jnp.where(valid, z, -_BIG)
        zmn = jnp.where(valid, z, _BIG)
    else:
        zmx = zmn = z
    mx_ref[0] = jnp.maximum(mx_ref[0], jnp.max(zmx, axis=0, keepdims=True))
    mn_ref[0] = jnp.minimum(mn_ref[0], jnp.min(zmn, axis=0, keepdims=True))


def fc_head_kernel(x_ref, w1_ref, g1_ref, w2_ref, g2_ref, w3_ref, b3_ref, o_ref):
    """Fused fc1 -> BN -> ReLU -> fc2 -> BN -> ReLU -> fc3 (+bias). Rows = batch,
    so training-mode BN stats fit inside the single block."""
    def bn_relu(z, g):
        mean = jnp.mean(z, axis=0, keepdims=True)
        var = jnp.mean(jnp.square(z - mean), axis=0, keepdims=True)  # biased var
        y = (z - mean) * lax.rsqrt(var + _BN_EPS)
        return jnp.maximum(y * g[0:1] + g[1:2], 0.0)

    h = x_ref[...].astype(jnp.bfloat16)
    z1 = jnp.dot(h, w1_ref[...], preferred_element_type=jnp.float32)
    h1 = bn_relu(z1, g1_ref[...])
    z2 = jnp.dot(h1.astype(jnp.bfloat16), w2_ref[...],
                 preferred_element_type=jnp.float32)
    h2 = bn_relu(z2, g2_ref[...])
    z3 = jnp.dot(h2.astype(jnp.bfloat16), w3_ref[...],
                 preferred_element_type=jnp.float32)
    o_ref[...] = z3 + b3_ref[...]


# --------------------------------------------------------------------------
# pallas_call wrappers
# --------------------------------------------------------------------------
def _conv_setup(x, w, plan, cout):
    B, _n_pad, cin = x.shape
    tn = plan.tile(cin, cout)
    nb = plan.half // tn
    S = plan.nsplit
    grid = (B, S, nb)
    wb = (w if w.ndim == 3 else w[None]).astype(jnp.bfloat16)
    if wb.shape[0] == 1:
        w_idx = lambda b, h, n: (0, 0, 0)        # shared weight: resident
    else:
        w_idx = lambda b, h, n: (b, 0, 0)        # per-batch folded weight
    in_specs = [
        pl.BlockSpec((1, tn, cin), lambda b, h, n: (b, h * nb + n, 0)),
        pl.BlockSpec((2, cin), lambda b, h, n: (0, 0)),
        pl.BlockSpec((1, cin, cout), w_idx),
    ]

    def stat_spec(c):
        return pl.BlockSpec((1, 1, c), lambda b, h, n: (b * S + h, 0, 0))

    return B, cin, tn, nb, S, grid, wb, in_specs, stat_spec


def conv_stats(x, w, aff, plan, *, pre_relu):
    cout = w.shape[-1]
    B, _cin, tn, nb, S, grid, wb, in_specs, stat_spec = _conv_setup(x, w, plan, cout)
    kern = functools.partial(conv_stats_kernel, pre_relu=pre_relu,
                             masked=plan.masked, n_real=plan.n, tn=tn, nb=nb)
    return pl.pallas_call(
        kern, grid=grid, in_specs=in_specs,
        out_specs=[pl.BlockSpec((1, tn, cout), lambda b, h, n: (b, h * nb + n, 0)),
                   stat_spec(cout), stat_spec(cout)],
        out_shape=[jax.ShapeDtypeStruct((B, plan.n_pad, cout), jnp.bfloat16),
                   jax.ShapeDtypeStruct((B * S, 1, cout), jnp.float32),
                   jax.ShapeDtypeStruct((B * S, 1, cout), jnp.float32)],
        compiler_params=pltpu.CompilerParams(
            dimension_semantics=("parallel", "parallel", "arbitrary"),
            vmem_limit_bytes=_VMEM_LIMIT),
    )(x, aff, wb)


def conv_reduce(x, w, aff, plan, *, pre_relu):
    cout = w.shape[-1]
    B, cin, tn, nb, S, grid, wb, in_specs, stat_spec = _conv_setup(x, w, plan, cout)
    kern = functools.partial(conv_reduce_kernel, pre_relu=pre_relu,
                             masked=plan.masked, n_real=plan.n, tn=tn, nb=nb)
    cs, g, mx, mn = pl.pallas_call(
        kern, grid=grid, in_specs=in_specs,
        out_specs=[stat_spec(cin),
                   pl.BlockSpec((1, cin, cin), lambda b, h, n: (b * S + h, 0, 0)),
                   stat_spec(cout), stat_spec(cout)],
        out_shape=[jax.ShapeDtypeStruct((B * S, 1, cin), jnp.float32),
                   jax.ShapeDtypeStruct((B * S, cin, cin), jnp.float32),
                   jax.ShapeDtypeStruct((B * S, 1, cout), jnp.float32),
                   jax.ShapeDtypeStruct((B * S, 1, cout), jnp.float32)],
        compiler_params=pltpu.CompilerParams(
            dimension_semantics=("parallel", "parallel", "arbitrary"),
            vmem_limit_bytes=_VMEM_LIMIT),
    )(x, aff, wb)
    return cs, g, mx, mn, wb


def fc_head(pool, w1, g1, w2, g2, w3, b3):
    B = pool.shape[0]
    kk = w3.shape[1]
    args = (pool, w1.astype(jnp.bfloat16), g1, w2.astype(jnp.bfloat16), g2,
            w3.astype(jnp.bfloat16), b3)

    def full(a):
        return pl.BlockSpec(a.shape, lambda i: (0, 0))

    return pl.pallas_call(
        fc_head_kernel,
        grid=(1,),
        in_specs=[full(a) for a in args],
        out_specs=pl.BlockSpec((B, kk), lambda i: (0, 0)),
        out_shape=jax.ShapeDtypeStruct((B, kk), jnp.float32),
        compiler_params=pltpu.CompilerParams(
            dimension_semantics=("arbitrary",),
            vmem_limit_bytes=_VMEM_LIMIT),
    )(*args)


# --------------------------------------------------------------------------
# Tiny per-channel JAX glue (BN finalize / fused BN+max-pool finalize)
# --------------------------------------------------------------------------
def bn_affine(sum_b, sq_b, count, gamma, beta):
    s = jnp.sum(sum_b, axis=(0, 1))
    ss = jnp.sum(sq_b, axis=(0, 1))
    mean = s / count
    var = jnp.maximum(ss / count - mean * mean, 0.0)
    scale = gamma * lax.rsqrt(var + _BN_EPS)
    shift = beta - mean * scale
    # bf16 so the consuming kernel's affine runs natively on the bf16 VALU.
    return jnp.stack([scale, shift]).astype(jnp.bfloat16)       # (2, C)


def bn_pool_finalize(cs, g, mx, mn, wb, count, gamma, beta, plan, *, relu):
    """Finalize BN stats from input-side colsum/Gram and fold BN affine into the
    max-pool (track max AND min, select by sign(scale))."""
    S = plan.nsplit
    B = cs.shape[0] // S
    cin, cout = wb.shape[-2], wb.shape[-1]
    wf = wb.reshape(cin, cout).astype(jnp.float32)               # bf16 values, f32 math
    csb = jnp.sum(cs.reshape(B, S, cin), axis=1)                 # (B, Cin)
    gb = jnp.sum(g.reshape(B, S, cin, cin), axis=1)              # (B, Cin, Cin)
    sum_z = csb @ wf                                             # (B, Cout)
    sq_z = jnp.einsum("bij,ic,jc->bc", gb, wf, wf)               # (B, Cout)
    mean = jnp.sum(sum_z, axis=0) / count
    var = jnp.maximum(jnp.sum(sq_z, axis=0) / count - mean * mean, 0.0)
    scale = gamma * lax.rsqrt(var + _BN_EPS)
    shift = beta - mean * scale
    mx2 = jnp.max(mx.reshape(B, S, cout), axis=1)                # (B, Cout) pre-BN max
    mn2 = jnp.min(mn.reshape(B, S, cout), axis=1)                # (B, Cout) pre-BN min
    pooled = jnp.maximum(mx2 * scale, mn2 * scale) + shift       # exact sign select
    if relu:
        pooled = jnp.maximum(pooled, 0.0)
    return pooled                                                # (B, Cout) f32


def identity_affine(c):
    return jnp.concatenate([jnp.ones((1, c), jnp.bfloat16),
                            jnp.zeros((1, c), jnp.bfloat16)], axis=0)


# --------------------------------------------------------------------------
# Parameter init (PyTorch-default-like uniform(+-1/sqrt(fan_in)))
# --------------------------------------------------------------------------
def _uniform(key, shape, bound):
    return jax.random.uniform(key, shape, jnp.float32, -bound, bound)


def init_linear(key, cin, cout, bias):
    kw, kb = jax.random.split(key)
    bound = 1.0 / math.sqrt(cin)
    w = _uniform(kw, (cin, cout), bound)
    if bias:
        return w, _uniform(kb, (1, cout), bound)
    return w


def bn_gb(c):
    return jnp.ones((c,), jnp.float32), jnp.zeros((c,), jnp.float32)


def bn_gb_stacked(c):
    return jnp.concatenate([jnp.ones((1, c), jnp.float32),
                            jnp.zeros((1, c), jnp.float32)], axis=0)


def init_transform_net(key, k):
    ks = jax.random.split(key, 6)
    fc3_w, fc3_b = init_linear(ks[5], 256, k * k, True)
    return {
        "k": k,
        "c1_w": init_linear(ks[0], k, 64, False),   # biases before BN cancel exactly
        "c2_w": init_linear(ks[1], 64, 128, False),
        "c3_w": init_linear(ks[2], 128, 1024, False),
        "fc1_w": init_linear(ks[3], 1024, 512, False),
        "fc2_w": init_linear(ks[4], 512, 256, False),
        "fc3_w": fc3_w,
        "fc3_b": fc3_b,
        "bn1": bn_gb(64), "bn2": bn_gb(128), "bn3": bn_gb(1024),
        "bn4": bn_gb_stacked(512), "bn5": bn_gb_stacked(256),
    }


def init_get_feature(key):
    ks = jax.random.split(key, 5)
    return {
        "tnet1": init_transform_net(ks[0], 3),
        "tnet2": init_transform_net(ks[1], 64),
        "conv1_w": init_linear(ks[2], 3, 64, False),
        "conv2_w": init_linear(ks[3], 64, 128, False),
        "conv3_w": init_linear(ks[4], 128, 1024, False),
        "bn1": bn_gb(64), "bn2": bn_gb(128), "bn3": bn_gb(1024),
    }


# --------------------------------------------------------------------------
# Forward passes
# --------------------------------------------------------------------------
def transform_net_fwd(p, z_in, aff_in, relu_in, count, plan):
    """TransformNet applied to h = act(aff_in(z_in)); returns (B, k, k)."""
    B = z_in.shape[0]
    k = p["k"]
    z1, s1, q1 = conv_stats(z_in, p["c1_w"], aff_in, plan, pre_relu=relu_in)
    a1 = bn_affine(s1, q1, count, *p["bn1"])
    z2, s2, q2 = conv_stats(z1, p["c2_w"], a1, plan, pre_relu=True)
    a2 = bn_affine(s2, q2, count, *p["bn2"])
    cs3, g3, mx3, mn3, w3b = conv_reduce(z2, p["c3_w"], a2, plan, pre_relu=True)
    pool = bn_pool_finalize(cs3, g3, mx3, mn3, w3b, count, *p["bn3"], plan,
                            relu=True)                               # (B, 1024)
    iden = jnp.eye(k, dtype=jnp.float32).reshape(1, k * k)
    t = fc_head(pool, p["fc1_w"], p["bn4"], p["fc2_w"], p["bn5"],
                p["fc3_w"], p["fc3_b"] + iden)
    return t.reshape(B, k, k)


def get_feature_fwd(params, x_ncw):
    """x_ncw: (B, 3, N) as in the PyTorch module. Returns (B, 1024)."""
    x = jnp.transpose(x_ncw, (0, 2, 1)).astype(jnp.float32)         # (B, N, 3)
    B, N, _ = x.shape
    plan = _TilePlan(N)
    if plan.n_pad != N:
        x = jnp.pad(x, ((0, 0), (0, plan.n_pad - N), (0, 0)))       # zero pad rows
    x = x.astype(jnp.bfloat16)
    count = B * N                                                    # real sample count
    id3 = identity_affine(3)

    trans = transform_net_fwd(params["tnet1"], x, id3, False, count, plan)    # (B,3,3)

    # Fold the 3x3 point transform into conv1: (x @ T) @ W1 == x @ (T @ W1).
    w1b = jnp.einsum("bij,jk->bik", trans, params["conv1_w"])                 # (B,3,64)
    z1, s1, q1 = conv_stats(x, w1b, id3, plan, pre_relu=False)
    a1 = bn_affine(s1, q1, count, *params["bn1"])

    # NOTE: the two z1 readers (TNet2's first conv and the main conv2) cannot be
    # fused: conv2's folded weight needs trans_feat = TNet2(z1) which itself
    # consumes z1 through its whole forward -> strict serial dependency.
    trans_feat = transform_net_fwd(params["tnet2"], z1, a1, True, count, plan)

    # Fold the 64x64 feature transform into conv2.
    w2b = jnp.einsum("bij,jk->bik", trans_feat, params["conv2_w"])            # (B,64,128)
    z2, s2, q2 = conv_stats(z1, w2b, a1, plan, pre_relu=True)
    a2 = bn_affine(s2, q2, count, *params["bn2"])

    # conv3 + bn3 + max-pool fused: only per-(batch,half,channel) reductions leave VMEM.
    cs3, g3, mx3, mn3, w3b = conv_reduce(z2, params["conv3_w"], a2, plan,
                                         pre_relu=True)
    return bn_pool_finalize(cs3, g3, mx3, mn3, w3b, count, *params["bn3"], plan,
                            relu=False)


# --------------------------------------------------------------------------
if __name__ == "__main__":
    key = jax.random.PRNGKey(0)
    pkey, xkey = jax.random.split(key)

    B, C, N = 2, 3, 16
    params = init_get_feature(pkey)
    x = jax.random.normal(xkey, (B, C, N), jnp.float32)   # PyTorch NCW input

    out = jax.block_until_ready(get_feature_fwd(params, x))
    assert out.shape == (B, 1024), out.shape
    assert bool(jnp.all(jnp.isfinite(out)))
    print("KERNEL_OK")
</pallas_src>

<mosaic_0001>
module attributes {stable_mosaic.version = 11 : i64} {
  func.func @conv_stats_kernel(%arg0: i32, %arg1: i32, %arg2: i32, %arg3: memref<1x128x3xbf16, #tpu.memory_space<vmem>>, %arg4: memref<2x3xbf16, #tpu.memory_space<vmem>>, %arg5: memref<1x3x64xbf16, #tpu.memory_space<vmem>>, %arg6: memref<1x128x64xbf16, #tpu.memory_space<vmem>>, %arg7: memref<1x1x64xf32, #tpu.memory_space<vmem>>, %arg8: memref<1x1x64xf32, #tpu.memory_space<vmem>>) attributes {dimension_semantics = [#tpu.dimension_semantics<parallel>, #tpu.dimension_semantics<parallel>, #tpu.dimension_semantics<arbitrary>], iteration_bounds = array<i64: 2, 1, 1>, scalar_prefetch = 0 : i64, scratch_operands = 0 : i64, tpu.core_type = #tpu.core_type<tc>, window_params = [{transform_indices = @transform_0, window_bounds = array<i64: 1, 128, 3>}, {pipeline_mode = #tpu.pipeline_mode<synchronous>, transform_indices = @transform_1, window_bounds = array<i64: 2, 3>}, {pipeline_mode = #tpu.pipeline_mode<synchronous>, transform_indices = @transform_2, window_bounds = array<i64: 1, 3, 64>}, {transform_indices = @transform_3, window_bounds = array<i64: 1, 128, 64>}, {transform_indices = @transform_4, window_bounds = array<i64: 1, 1, 64>}, {transform_indices = @transform_5, window_bounds = array<i64: 1, 1, 64>}]} {
    %c0_i32 = arith.constant 0 : i32
    %0 = arith.cmpi eq, %arg2, %c0_i32 : i32
    %1 = arith.extui %0 : i1 to i32
    %c0_i32_0 = arith.constant 0 : i32
    %2 = arith.cmpi ne, %1, %c0_i32_0 : i32
    scf.if %2 {
      %cst_26 = arith.constant 0.000000e+00 : f32
      %48 = vector.broadcast %cst_26 : f32 to vector<1x1x64xf32>
      %c0_27 = arith.constant 0 : index
      %c0_28 = arith.constant 0 : index
      %c0_29 = arith.constant 0 : index
      %49 = vector.load %arg7[%c0_27, %c0_28, %c0_29] : memref<1x1x64xf32, #tpu.memory_space<vmem>>, vector<1x1x64xf32>
      tpu.vector_store %arg7[%c0_27, %c0_28, %c0_29], %48 {strides = array<i32>} : memref<1x1x64xf32, #tpu.memory_space<vmem>>, vector<1x1x64xf32>,
      %cst_30 = arith.constant 0.000000e+00 : f32
      %50 = vector.broadcast %cst_30 : f32 to vector<1x1x64xf32>
      %c0_31 = arith.constant 0 : index
      %c0_32 = arith.constant 0 : index
      %c0_33 = arith.constant 0 : index
      %51 = vector.load %arg8[%c0_31, %c0_32, %c0_33] : memref<1x1x64xf32, #tpu.memory_space<vmem>>, vector<1x1x64xf32>
      tpu.vector_store %arg8[%c0_31, %c0_32, %c0_33], %50 {strides = array<i32>} : memref<1x1x64xf32, #tpu.memory_space<vmem>>, vector<1x1x64xf32>,
    } else {
    }
    %c0 = arith.constant 0 : index
    %c0_1 = arith.constant 0 : index
    %3 = vector.load %arg4[%c0, %c0_1] : memref<2x3xbf16, #tpu.memory_space<vmem>>, vector<2x3xbf16>
    %c0_2 = arith.constant 0 : index
    %c0_3 = arith.constant 0 : index
    %c0_4 = arith.constant 0 : index
    %4 = vector.load %arg3[%c0_2, %c0_3, %c0_4] : memref<1x128x3xbf16, #tpu.memory_space<vmem>>, vector<1x128x3xbf16>
    %5 = vector.shape_cast %4 : vector<1x128x3xbf16> to vector<128x3xbf16>
    %6 = vector.extract_strided_slice %3 {offsets = [0, 0], sizes = [1, 3], strides = [1, 1]} : vector<2x3xbf16> to vector<1x3xbf16>
    %7 = vector.broadcast %6 : vector<1x3xbf16> to vector<128x3xbf16>
    %8 = arith.mulf %5, %7 : vector<128x3xbf16>
    %9 = vector.extract_strided_slice %3 {offsets = [1, 0], sizes = [1, 3], strides = [1, 1]} : vector<2x3xbf16> to vector<1x3xbf16>
    %10 = vector.broadcast %9 : vector<1x3xbf16> to vector<128x3xbf16>
    %11 = arith.addf %8, %10 : vector<128x3xbf16>
    %c1_i32 = arith.constant 1 : i32
    %12 = arith.muli %arg1, %c1_i32 : i32
    %13 = arith.addi %12, %arg2 : i32
    %c128_i32 = arith.constant 128 : i32
    %14 = arith.muli %13, %c128_i32 : i32
    %15 = tpu.iota {dimensions = array<i32: 0>} : vector<128x1xi32>
    %16 = vector.broadcast %14 : i32 to vector<128x1xi32>
    %17 = arith.addi %16, %15 : vector<128x1xi32>
    %c16_i32 = arith.constant 16 : i32
    %18 = vector.broadcast %c16_i32 : i32 to vector<128x1xi32>
    %19 = arith.cmpi slt, %17, %18 : vector<128x1xi32>
    %cst = arith.constant 0.000000e+00 : bf16
    %20 = vector.broadcast %cst : bf16 to vector<128x3xbf16>
    %21 = vector.shape_cast %19 : vector<128x1xi1> to vector<128x1xi1>
    %22 = vector.broadcast %21 : vector<128x1xi1> to vector<128x3xi1>
    %23 = arith.select %22, %11, %20 : vector<128x3xi1>, vector<128x3xbf16>
    %c0_5 = arith.constant 0 : index
    %c0_6 = arith.constant 0 : index
    %c0_7 = arith.constant 0 : index
    %24 = vector.load %arg5[%c0_5, %c0_6, %c0_7] : memref<1x3x64xbf16, #tpu.memory_space<vmem>>, vector<1x3x64xbf16>
    %25 = vector.shape_cast %24 : vector<1x3x64xbf16> to vector<3x64xbf16>
    %cst_8 = arith.constant dense<0.000000e+00> : vector<128x64xf32>
    %26 = tpu.matmul %23, %25, %cst_8 {dimension_numbers = #tpu.dot_dimension_numbers<[1], [0], [0], [1], [0, 0, 1, 1], [], []>} : vector<128x3xbf16>, vector<3x64xbf16>, vector<128x64xf32> -> vector<128x64xf32>
    %27 = arith.truncf %26 : vector<128x64xf32> to vector<128x64xbf16>
    %c0_9 = arith.constant 0 : index
    %c0_10 = arith.constant 0 : index
    %c0_11 = arith.constant 0 : index
    %28 = vector.load %arg6[%c0_9, %c0_10, %c0_11] : memref<1x128x64xbf16, #tpu.memory_space<vmem>>, vector<1x128x64xbf16>
    %29 = vector.shape_cast %28 : vector<1x128x64xbf16> to vector<128x64xbf16>
    %30 = vector.shape_cast %27 : vector<128x64xbf16> to vector<1x128x64xbf16>
    tpu.vector_store %arg6[%c0_9, %c0_10, %c0_11], %30 {strides = array<i32>} : memref<1x128x64xbf16, #tpu.memory_space<vmem>>, vector<1x128x64xbf16>,
    %c0_12 = arith.constant 0 : index
    %c0_13 = arith.constant 0 : index
    %c0_14 = arith.constant 0 : index
    %31 = vector.load %arg7[%c0_12, %c0_13, %c0_14] : memref<1x1x64xf32, #tpu.memory_space<vmem>>, vector<1x1x64xf32>
    %32 = vector.shape_cast %31 : vector<1x1x64xf32> to vector<1x64xf32>
    %cst_15 = arith.constant dense<0.000000e+00> : vector<64xf32>
    %33 = vector.multi_reduction <add>, %26, %cst_15 [0] : vector<128x64xf32> to vector<64xf32>
    %34 = vector.shape_cast %33 : vector<64xf32> to vector<1x64xf32>
    %35 = arith.addf %32, %34 : vector<1x64xf32>
    %c0_16 = arith.constant 0 : index
    %c0_17 = arith.constant 0 : index
    %c0_18 = arith.constant 0 : index
    %36 = vector.load %arg7[%c0_16, %c0_17, %c0_18] : memref<1x1x64xf32, #tpu.memory_space<vmem>>, vector<1x1x64xf32>
    %37 = vector.shape_cast %36 : vector<1x1x64xf32> to vector<1x64xf32>
    %38 = vector.shape_cast %35 : vector<1x64xf32> to vector<1x1x64xf32>
    tpu.vector_store %arg7[%c0_16, %c0_17, %c0_18], %38 {strides = array<i32>} : memref<1x1x64xf32, #tpu.memory_space<vmem>>, vector<1x1x64xf32>,
    %c0_19 = arith.constant 0 : index
    %c0_20 = arith.constant 0 : index
    %c0_21 = arith.constant 0 : index
    %39 = vector.load %arg8[%c0_19, %c0_20, %c0_21] : memref<1x1x64xf32, #tpu.memory_space<vmem>>, vector<1x1x64xf32>
    %40 = vector.shape_cast %39 : vector<1x1x64xf32> to vector<1x64xf32>
    %41 = arith.mulf %26, %26 : vector<128x64xf32>
    %cst_22 = arith.constant dense<0.000000e+00> : vector<64xf32>
    %42 = vector.multi_reduction <add>, %41, %cst_22 [0] : vector<128x64xf32> to vector<64xf32>
    %43 = vector.shape_cast %42 : vector<64xf32> to vector<1x64xf32>
    %44 = arith.addf %40, %43 : vector<1x64xf32>
    %c0_23 = arith.constant 0 : index
    %c0_24 = arith.constant 0 : index
    %c0_25 = arith.constant 0 : index
    %45 = vector.load %arg8[%c0_23, %c0_24, %c0_25] : memref<1x1x64xf32, #tpu.memory_space<vmem>>, vector<1x1x64xf32>
    %46 = vector.shape_cast %45 : vector<1x1x64xf32> to vector<1x64xf32>
    %47 = vector.shape_cast %44 : vector<1x64xf32> to vector<1x1x64xf32>
    tpu.vector_store %arg8[%c0_23, %c0_24, %c0_25], %47 {strides = array<i32>} : memref<1x1x64xf32, #tpu.memory_space<vmem>>, vector<1x1x64xf32>,
    return
  }
  func.func @transform_0(%arg0: i32, %arg1: i32, %arg2: i32) -> (i32, i32, i32) {
    %c1_i32 = arith.constant 1 : i32
    %0 = arith.muli %arg1, %c1_i32 : i32
    %1 = arith.addi %0, %arg2 : i32
    %c0_i32 = arith.constant 0 : i32
    %c0_i32_0 = arith.constant 0 : i32
    return %arg0, %1, %c0_i32 : i32, i32, i32
  }
  func.func @transform_1(%arg0: i32, %arg1: i32, %arg2: i32) -> (i32, i32) {
    %c0_i32 = arith.constant 0 : i32
    %c0_i32_0 = arith.constant 0 : i32
    %c0_i32_1 = arith.constant 0 : i32
    return %c0_i32, %c0_i32_0 : i32, i32
  }
  func.func @transform_2(%arg0: i32, %arg1: i32, %arg2: i32) -> (i32, i32, i32) {
    %c0_i32 = arith.constant 0 : i32
    %c0_i32_0 = arith.constant 0 : i32
    %c0_i32_1 = arith.constant 0 : i32
    %c0_i32_2 = arith.constant 0 : i32
    return %c0_i32, %c0_i32_0, %c0_i32_1 : i32, i32, i32
  }
  func.func @transform_3(%arg0: i32, %arg1: i32, %arg2: i32) -> (i32, i32, i32) {
    %c1_i32 = arith.constant 1 : i32
    %0 = arith.muli %arg1, %c1_i32 : i32
    %1 = arith.addi %0, %arg2 : i32
    %c0_i32 = arith.constant 0 : i32
    %c0_i32_0 = arith.constant 0 : i32
    return %arg0, %1, %c0_i32 : i32, i32, i32
  }
  func.func @transform_4(%arg0: i32, %arg1: i32, %arg2: i32) -> (i32, i32, i32) {
    %c1_i32 = arith.constant 1 : i32
    %0 = arith.muli %arg0, %c1_i32 : i32
    %1 = arith.addi %0, %arg1 : i32
    %c0_i32 = arith.constant 0 : i32
    %c0_i32_0 = arith.constant 0 : i32
    %c0_i32_1 = arith.constant 0 : i32
    return %1, %c0_i32, %c0_i32_0 : i32, i32, i32
  }
  func.func @transform_5(%arg0: i32, %arg1: i32, %arg2: i32) -> (i32, i32, i32) {
    %c1_i32 = arith.constant 1 : i32
    %0 = arith.muli %arg0, %c1_i32 : i32
    %1 = arith.addi %0, %arg1 : i32
    %c0_i32 = arith.constant 0 : i32
    %c0_i32_0 = arith.constant 0 : i32
    %c0_i32_1 = arith.constant 0 : i32
    return %1, %c0_i32, %c0_i32_0 : i32, i32, i32
  }
}

</mosaic_0001>

<llo_original>
// kernel: tpu_custom_call.1
$region0: #{tpu_custom_call.1}
  #allocation0 [shape = 'u32[]', space=smem, size = 0x4, offset = 0x4, fixed_abs, tag = 'smem constant byte address 0x4 - core index']
  #allocation1 [shape = 'u32[144,128]{1,0:T(1,128)}', space=vmem, size = 0x12000, scoped, tag = 'internal scratch']
  %s0 = inlined_call_operand.vmem [shape: bf16[2,128,3], index: 0, kind: input, shape index: {}]
  %s1 = inlined_call_operand.vmem [shape: bf16[2,3], index: 1, kind: input, shape index: {}]
  %s2 = inlined_call_operand.vmem [shape: bf16[1,3,64], index: 2, kind: input, shape index: {}]
  %s3 = inlined_call_operand.vmem [shape: bf16[2,128,64], index: 3, kind: output, shape index: {0}]
  %s4 = inlined_call_operand.hbm [shape: f32[2,1,64], index: 4, kind: output, shape index: {1}]
  %s5 = inlined_call_operand.hbm [shape: f32[2,1,64], index: 5, kind: output, shape index: {2}]
  %6 = xla_tuple %s3, %s4, %s5
  %s7 = sld [smem:[#allocation0]]
  $region65: #{tpu_custom_call.1} parent=0
    _
  %s9 = ssub.s32 1, %s7
  %s10 = scalar_select 0, %s9, %s7
  $region1: #{tpu_custom_call.1} parent=0
    #allocation2 [shape = 'u8[1024]{0}', space=vmem, size = 0x400, scoped, tag = 'output window, operand 1']
    #allocation3 [shape = 's32[2]{0}', space=sflag, size = 0x8, scoped, tag = 'scoped memory for tpu_custom_call.1']
    #allocation4 [shape = 'u8[1024]{0}', space=vmem, size = 0x400, scoped, tag = 'output window, operand 2']
    #allocation5 [shape = 's32[2]{0}', space=sflag, size = 0x8, scoped, tag = 'scoped memory for tpu_custom_call.1']
    %11 = vsyncpa [#allocation3], 0
    %s12 = scalar_lea.sflag [#allocation3], 1
    %13 = vsyncpa %s12, 0
    %14 = vsyncpa [#allocation5], 0
    %s15 = scalar_lea.sflag [#allocation5], 1
    %16 = vsyncpa %s15, 0
    loop: start=0, step=1, limit=4
    $region2: #{tpu_custom_call.1} parent=1 // loop_pre_header
      _
    $region3: #{tpu_custom_call.1} parent=1 // loop_header
      %s18 = sphi 0, %s22
      %p19 = scmp.ge.s32.totalorder %s18, 4
      %s25 = sphi 0, %s44
      %s26 = sphi 0, %s40
      %s27 = sphi 0, %s36
      %s28 = sphi 0, %s25
      %s29 = sphi 0, %s26
      %s30 = sphi 0, %s27
      %s31 = sphi 0, %s28
      %s32 = sphi 0, %s29
      %s33 = sphi 0, %s30
      %s51 = sphi 0, %s53
      %s54 = sphi 0, %s51
      %s55 = sphi 0, %s54
      %s71 = sphi 0, %s55
      %s75 = sphi 0, %s75
      %s77 = sphi 0, %s75
      %s78 = sphi 0, %s77
      %s92 = sphi 0, %s78
      %s96 = sphi 0, %s96
      %s98 = sphi 0, %s96
      %s99 = sphi 0, %s98
      %s113 = sphi 0, %s99
      %s123 = sphi 0, %s125
      %s126 = sphi 0, %s123
      %s127 = sphi 0, %s126
      %s143 = sphi 0, %s127
      %s151 = sphi 0, %s153
      %s154 = sphi 0, %s151
      %s155 = sphi 0, %s154
      %s171 = sphi 0, %s155
      %s179 = sphi 0, %s181
      %s182 = sphi 0, %s179
      %s183 = sphi 0, %s182
      %s199 = sphi 0, %s183
    $region4: #{tpu_custom_call.1} parent=1 // loop_header_branch
      %21 = sbr.rel (%p19) target = $region8
    $region5: #{tpu_custom_call.1} parent=1 // loop_body
      %s23 = ssub.s32 %s18, 1
      %s24 = ssub.s32 %s18, 2
      %s34 = sadd.s32 1, %s27
      %p35 = scmp.ge.s32.totalorder %s34, 1
      %s36 = scalar_select %p35, 0, %s34
      %s37 = sadd.s32 1, %s26
      %s38 = scalar_select %p35, %s37, %s26
      %p39 = scmp.ge.s32.totalorder %s38, 1
      %s40 = scalar_select %p39, 0, %s38
      %s41 = sadd.s32 1, %s25
      %s42 = scalar_select %p39, %s41, %s25
      %p43 = scmp.ge.s32.totalorder %s42, 2
      %s44 = scalar_select %p43, 0, %s42
      %s45 = sadd.s32 %s26, %s27
      %s46 = sadd.s32 %s40, %s36
      %s47 = ssub.s32 %s25, %s44
      %s48 = ssub.s32 %s45, %s46
      %s49 = sor.u32 %s47, %s48
      %p50 = scmp.eq.s32.totalorder %s49, 0
      %s52 = sadd.s32 %s51, 1
      %s53 = scalar_select %p50, %s51, %s52
      %p56 = pneg %p50
      %p57 = scmp.eq.s32.totalorder %s18, 1
      %p58 = por %p56, %p57
      %p59 = scmp.ne.s32.totalorder %s51, %s54
      %p60 = scmp.eq.s32.totalorder %s18, 0
      %p61 = por %p59, %p60
      %p62 = scmp.ne.s32.totalorder %s51, %s54
      %p63 = scmp.eq.s32.totalorder %s23, 1
      %p64 = por %p62, %p63
      %p65 = scmp.ne.s32.totalorder %s54, %s55
      %p66 = scmp.eq.s32.totalorder %s23, 0
      %p67 = por %p65, %p66
      %p68 = scmp.ne.s32.totalorder %s54, %s55
      %p69 = scmp.eq.s32.totalorder %s24, 1
      %p70 = por %p68, %p69
      %p72 = scmp.ne.s32.totalorder %s55, %s71
      %p73 = scmp.eq.s32.totalorder %s24, 0
      %p74 = por %p72, %p73
      %s76 = sadd.s32 %s75, 1
      %p79 = scmp.eq.s32.totalorder %s18, 1
      %p80 = scmp.ne.s32.totalorder %s75, %s77
      %p81 = scmp.eq.s32.totalorder %s18, 0
      %p82 = por %p80, %p81
      %p83 = scmp.ne.s32.totalorder %s75, %s77
      %p84 = scmp.eq.s32.totalorder %s23, 1
      %p85 = por %p83, %p84
      %p86 = scmp.ne.s32.totalorder %s77, %s78
      %p87 = scmp.eq.s32.totalorder %s23, 0
      %p88 = por %p86, %p87
      %p89 = scmp.ne.s32.totalorder %s77, %s78
      %p90 = scmp.eq.s32.totalorder %s24, 1
      %p91 = por %p89, %p90
      %p93 = scmp.ne.s32.totalorder %s78, %s92
      %p94 = scmp.eq.s32.totalorder %s24, 0
      %p95 = por %p93, %p94
      %s97 = sadd.s32 %s96, 1
      %p100 = scmp.eq.s32.totalorder %s18, 1
      %p101 = scmp.ne.s32.totalorder %s96, %s98
      %p102 = scmp.eq.s32.totalorder %s18, 0
      %p103 = por %p101, %p102
      %p104 = scmp.ne.s32.totalorder %s96, %s98
      %p105 = scmp.eq.s32.totalorder %s23, 1
      %p106 = por %p104, %p105
      %p107 = scmp.ne.s32.totalorder %s98, %s99
      %p108 = scmp.eq.s32.totalorder %s23, 0
      %p109 = por %p107, %p108
      %p110 = scmp.ne.s32.totalorder %s98, %s99
      %p111 = scmp.eq.s32.totalorder %s24, 1
      %p112 = por %p110, %p111
      %p114 = scmp.ne.s32.totalorder %s99, %s113
      %p115 = scmp.eq.s32.totalorder %s24, 0
      %p116 = por %p114, %p115
      %s117 = sadd.s32 %s26, %s27
      %s118 = sadd.s32 %s40, %s36
      %s119 = ssub.s32 %s25, %s44
      %s120 = ssub.s32 %s117, %s118
      %s121 = sor.u32 %s119, %s120
      %p122 = scmp.eq.s32.totalorder %s121, 0
      %s124 = sadd.s32 %s123, 1
      %s125 = scalar_select %p122, %s123, %s124
      %p128 = pneg %p122
      %p129 = scmp.eq.s32.totalorder %s18, 1
      %p130 = por %p128, %p129
      %p131 = scmp.ne.s32.totalorder %s123, %s126
      %p132 = scmp.eq.s32.totalorder %s18, 0
      %p133 = por %p131, %p132
      %p134 = scmp.ne.s32.totalorder %s123, %s126
      %p135 = scmp.eq.s32.totalorder %s23, 1
      %p136 = por %p134, %p135
      %p137 = scmp.ne.s32.totalorder %s126, %s127
      %p138 = scmp.eq.s32.totalorder %s23, 0
      %p139 = por %p137, %p138
      %p140 = scmp.ne.s32.totalorder %s126, %s127
      %p141 = scmp.eq.s32.totalorder %s24, 1
      %p142 = por %p140, %p141
      %p144 = scmp.ne.s32.totalorder %s127, %s143
      %p145 = scmp.eq.s32.totalorder %s24, 0
      %p146 = por %p144, %p145
      %s147 = sadd.s32 %s25, %s26
      %s148 = sadd.s32 %s44, %s40
      %s149 = ssub.s32 %s147, %s148
      %p150 = scmp.eq.s32.totalorder %s149, 0
      %s152 = sadd.s32 %s151, 1
      %s153 = scalar_select %p150, %s151, %s152
      %p156 = pneg %p150
      %p157 = scmp.eq.s32.totalorder %s18, 1
      %p158 = por %p156, %p157
      %p159 = scmp.ne.s32.totalorder %s151, %s154
      %p160 = scmp.eq.s32.totalorder %s18, 0
      %p161 = por %p159, %p160
      %p162 = scmp.ne.s32.totalorder %s151, %s154
      %p163 = scmp.eq.s32.totalorder %s23, 1
      %p164 = por %p162, %p163
      %p165 = scmp.ne.s32.totalorder %s154, %s155
      %p166 = scmp.eq.s32.totalorder %s23, 0
      %p167 = por %p165, %p166
      %p168 = scmp.ne.s32.totalorder %s154, %s155
      %p169 = scmp.eq.s32.totalorder %s24, 1
      %p170 = por %p168, %p169
      %p172 = scmp.ne.s32.totalorder %s155, %s171
      %p173 = scmp.eq.s32.totalorder %s24, 0
      %p174 = por %p172, %p173
      %s175 = sadd.s32 %s25, %s26
      %s176 = sadd.s32 %s44, %s40
      %s177 = ssub.s32 %s175, %s176
      %p178 = scmp.eq.s32.totalorder %s177, 0
      %s180 = sadd.s32 %s179, 1
      %s181 = scalar_select %p178, %s179, %s180
      %p184 = pneg %p178
      %p185 = scmp.eq.s32.totalorder %s18, 1
      %p186 = por %p184, %p185
      %p187 = scmp.ne.s32.totalorder %s179, %s182
      %p188 = scmp.eq.s32.totalorder %s18, 0
      %p189 = por %p187, %p188
      %p190 = scmp.ne.s32.totalorder %s179, %s182
      %p191 = scmp.eq.s32.totalorder %s23, 1
      %p192 = por %p190, %p191
      %p193 = scmp.ne.s32.totalorder %s182, %s183
      %p194 = scmp.eq.s32.totalorder %s23, 0
      %p195 = por %p193, %p194
      %p196 = scmp.ne.s32.totalorder %s182, %s183
      %p197 = scmp.eq.s32.totalorder %s24, 1
      %p198 = por %p196, %p197
      %p200 = scmp.ne.s32.totalorder %s183, %s199
      %p201 = scmp.eq.s32.totalorder %s24, 0
      %p202 = por %p200, %p201
      %p203 = scmp.le.s32.totalorder 1, %s18
      %p204 = scmp.lt.s32.totalorder %s18, 3
      %p205 = pnand %p203, %p204
      %p206 = pneg %p205
      // Predicated region
      $region9: #{tpu_custom_call.1} parent=5 // pred_check
        _
      $region10: #{tpu_custom_call.1} parent=5 // pred_check_branch
        %208 = sbr.rel (%p205) target = $region12
      $region11: #{tpu_custom_call.1} parent=5 // pred_region
        %s209 = ssub.s32 %s18, 1
        // Predicated region
        $region13: #{tpu_custom_call.1} parent=11 // pred_check
          %p210 = pneg %p88
        $region14: #{tpu_custom_call.1} parent=11 // pred_check_branch
          %212 = sbr.rel (%p210) target = $region16
        $region15: #{tpu_custom_call.1} parent=11 // pred_region
          _
        $region16: #{tpu_custom_call.1} parent=11 // pred_fallthru
          _
        // Predicated region
        $region17: #{tpu_custom_call.1} parent=11 // pred_check
          %p213 = pneg %p109
        $region18: #{tpu_custom_call.1} parent=11 // pred_check_branch
          %215 = sbr.rel (%p213) target = $region20
        $region19: #{tpu_custom_call.1} parent=11 // pred_region
          _
        $region20: #{tpu_custom_call.1} parent=11 // pred_fallthru
          _
      $region12: #{tpu_custom_call.1} parent=5 // pred_fallthru
        _
      %p216 = scmp.lt.s32.totalorder %s18, 2
      // Predicated region
      $region21: #{tpu_custom_call.1} parent=5 // pred_check
        %p217 = pneg %p216
      $region22: #{tpu_custom_call.1} parent=5 // pred_check_branch
        %219 = sbr.rel (%p217) target = $region24
      $region23: #{tpu_custom_call.1} parent=5 // pred_region
        // Predicated region
        $region25: #{tpu_custom_call.1} parent=23 // pred_check
          %p220 = pneg %p61
        $region26: #{tpu_custom_call.1} parent=23 // pred_check_branch
          %222 = sbr.rel (%p220) target = $region28
        $region27: #{tpu_custom_call.1} parent=23 // pred_region
          %s223 = sadd.s32 %s26, %s27
          %s224 = smul.u32 16, %s223
          %p225 = scmp.lt.s32.totalorder %s25, 1
          %s226 = scalar_select %p225, %s25, 1
          %p227 = scmp.lt.s32.totalorder %s224, 15
          %s228 = scalar_select %p227, %s224, 15
          %s229 = smul.addr %s226, 16
          %s230 = sadd.s32 %s228, %s229
          %s231 = smul.addr %s230, 4
          %s232 = scalar_lea.vmem %s0, %s231
          %s233 = sadd.s32 %s26, %s27
          %s234 = smul.u32 16, %s233
        $region28: #{tpu_custom_call.1} parent=23 // pred_fallthru
          _
      $region24: #{tpu_custom_call.1} parent=5 // pred_fallthru
        _
      %p235 = scmp.le.s32.totalorder 1, %s18
      %p236 = scmp.lt.s32.totalorder %s18, 3
      %p237 = pnand %p235, %p236
      %p238 = pneg %p237
      // Predicated region
      $region29: #{tpu_custom_call.1} parent=5 // pred_check
        _
      $region30: #{tpu_custom_call.1} parent=5 // pred_check_branch
        %240 = sbr.rel (%p237) target = $region32
      $region31: #{tpu_custom_call.1} parent=5 // pred_region
        %s241 = ssub.s32 %s18, 1
        %s242 = sadd.s32 %s29, %s30
        %s243 = smul.u32 16, %s242
        %p244 = scmp.lt.s32.totalorder %s28, 1
        %s245 = scalar_select %p244, %s28, 1
        %p246 = scmp.lt.s32.totalorder %s243, 15
        %s247 = scalar_select %p246, %s243, 15
        %s248 = smul.addr %s245, 16
        %s249 = sadd.s32 %s247, %s248
        %s250 = smul.addr %s249, 4
        %s251 = scalar_lea.vmem %s0, %s250
        %p252 = pneg %p67
        %p253 = pneg %p64
        %p254 = pneg %p88
        %p255 = pneg %p85
        %p256 = pneg %p109
        %p257 = pneg %p106
        %p258 = pneg %p139
        %p259 = pneg %p136
        %s260 = sadd.s32 %s29, %s30
        %s261 = smul.u32 16, %s260
        %p262 = scmp.lt.s32.totalorder %s28, 1
        %s263 = scalar_select %p262, %s28, 1
        %p264 = scmp.lt.s32.totalorder %s261, 15
        %s265 = scalar_select %p264, %s261, 15
        %s266 = smul.addr %s263, 16
        %s267 = sadd.s32 %s265, %s266
        %s268 = smul.addr %s267, 4
        %s269 = scalar_lea.vmem %s3, %s268
        %p270 = pneg %p167
        %p271 = pneg %p164
        %s272 = sand.u32 %s154, 1
        %s273 = scalar_lea.sflag [#allocation3], %s272
        %s274 = sand.u32 %s154, 1
        %s275 = scalar_lea.vmem [#allocation2], %s274
        %p276 = pneg %p195
        %p277 = pneg %p192
        %s278 = sand.u32 %s182, 1
        %s279 = scalar_lea.sflag [#allocation5], %s278
        %s280 = sand.u32 %s182, 1
        %s281 = scalar_lea.vmem [#allocation4], %s280
        %s282 = sadd.s32 %s29, %s30
        %s283 = smul.u32 16, %s282
        %p284 = scmp.lt.s32.totalorder %s28, 1
        %s285 = scalar_select %p284, %s28, 1
        %p286 = scmp.lt.s32.totalorder %s283, 15
        %s287 = scalar_select %p286, %s283, 15
        %s288 = smul.addr %s285, 16
        %s289 = sadd.s32 %s287, %s288
        %s290 = smul.addr %s289, 4
        %s291 = scalar_lea.vmem %s0, %s290
        %s292 = sadd.s32 %s29, %s30
        %s293 = smul.u32 16, %s292
        %s294 = sadd.s32 %s29, %s30
        %s295 = smul.u32 16, %s294
        %p296 = scmp.lt.s32.totalorder %s28, 1
        %s297 = scalar_select %p296, %s28, 1
        %p298 = scmp.lt.s32.totalorder %s295, 15
        %s299 = scalar_select %p298, %s295, 15
        %s300 = smul.addr %s297, 16
        %s301 = sadd.s32 %s299, %s300
        %s302 = smul.addr %s301, 4
        %s303 = scalar_lea.vmem %s3, %s302
        %s304 = sadd.s32 %s29, %s30
        %s305 = smul.u32 16, %s304
        %s306 = sadd.s32 %s28, %s29
        %s307 = sadd.s32 %s28, %s29
        %p309 = scmp.eq.s32.totalorder %s30, 0
        // Predicated region
        $region33: #{tpu_custom_call.1} parent=31 // pred_check
          %p310 = pneg %p309
        $region34: #{tpu_custom_call.1} parent=31 // pred_check_branch
          %312 = sbr.rel (%p310) target = $region36
        $region35: #{tpu_custom_call.1} parent=31 // pred_region
          %vm313 = vcmask 516096
          %314 = vst.msk [vmem:[%s275] sm:$0x1] %vm313, 0.0
          %315 = vst.msk [vmem:[%s281] sm:$0x1] %vm313, 0.0
        $region36: #{tpu_custom_call.1} parent=31 // pred_fallthru
          _
        %v316 = vld [vmem:[%s1] sm:$0x1]
        %v317 = vld [vmem:[%s291] sm:$0xf]
        %v318 = vld [vmem:[%s291 + $0x4] sm:$0xf]
        %v319 = vld [vmem:[%s291 + $0x8] sm:$0xf]
        %v320 = vld [vmem:[%s291 + $0xc] sm:$0xf]
        %v321 = vld [vmem:[%s291 + $0x10] sm:$0xf]
        %v322 = vld [vmem:[%s291 + $0x14] sm:$0xf]
        %v323 = vld [vmem:[%s291 + $0x18] sm:$0xf]
        %v324 = vld [vmem:[%s291 + $0x1c] sm:$0xf]
        %v325 = vld [vmem:[%s291 + $0x20] sm:$0xf]
        %v326 = vld [vmem:[%s291 + $0x24] sm:$0xf]
        %v327 = vld [vmem:[%s291 + $0x28] sm:$0xf]
        %v328 = vld [vmem:[%s291 + $0x2c] sm:$0xf]
        %v329 = vld [vmem:[%s291 + $0x30] sm:$0xf]
        %v330 = vld [vmem:[%s291 + $0x34] sm:$0xf]
        %v331 = vld [vmem:[%s291 + $0x38] sm:$0xf]
        %v332 = vld [vmem:[%s291 + $0x3c] sm:$0xf]
        %v334 = vpack.i.b16 %v316, %v316
        %v336 = vlaneseq
        %v337 = vshrl.u32 %v336, 7
        %v338 = vsub.s32 0, %v337
        %v339 = vrot.slane %v334, %v338
        %v341 = vunpack.c.l.b16 %v339
        %v342 = vpack.c.b16 %v341, %v341
        %v344 = vmul.bf16 %v317, %v342
        %v345 = vmul.bf16 %v318, %v342
        %v346 = vmul.bf16 %v319, %v342
        %v347 = vmul.bf16 %v320, %v342
        %v348 = vmul.bf16 %v321, %v342
        %v349 = vmul.bf16 %v322, %v342
        %v350 = vmul.bf16 %v323, %v342
        %v351 = vmul.bf16 %v324, %v342
        %v352 = vmul.bf16 %v325, %v342
        %v353 = vmul.bf16 %v326, %v342
        %v354 = vmul.bf16 %v327, %v342
        %v355 = vmul.bf16 %v328, %v342
        %v356 = vmul.bf16 %v329, %v342
        %v357 = vmul.bf16 %v330, %v342
        %v358 = vmul.bf16 %v331, %v342
        %v359 = vmul.bf16 %v332, %v342
        %v360 = vshrl.u32 %v316, 16
        %v361 = vpack.i.b16 %v360, %v360
        %v363 = vlaneseq
        %v364 = vshrl.u32 %v363, 7
        %v365 = vsub.s32 0, %v364
        %v366 = vrot.slane %v361, %v365
        %v368 = vunpack.c.l.b16 %v366
        %v369 = vpack.c.b16 %v368, %v368
        %v371 = vadd.bf16 %v344, %v369
        %v372 = vadd.bf16 %v345, %v369
        %v373 = vadd.bf16 %v346, %v369
        %v374 = vadd.bf16 %v347, %v369
        %v375 = vadd.bf16 %v348, %v369
        %v376 = vadd.bf16 %v349, %v369
        %v377 = vadd.bf16 %v350, %v369
        %v378 = vadd.bf16 %v351, %v369
        %v379 = vadd.bf16 %v352, %v369
        %v380 = vadd.bf16 %v353, %v369
        %v381 = vadd.bf16 %v354, %v369
        %v382 = vadd.bf16 %v355, %v369
        %v383 = vadd.bf16 %v356, %v369
        %v384 = vadd.bf16 %v357, %v369
        %v385 = vadd.bf16 %v358, %v369
        %v386 = vadd.bf16 %v359, %v369
        %s387 = sadd.s32 %s29, %s30
        %s388 = smul.u32 %s387, 128
        %v389 = vlaneseq
        %v390 = vshrl.u32 %v389, 7
        %v391 = vadd.s32 %v390, 8
        %v392 = vadd.s32 %v390, 16
        %v393 = vadd.s32 %v390, 24
        %v394 = vadd.s32 %v390, 32
        %v395 = vadd.s32 %v390, 40
        %v396 = vadd.s32 %v390, 48
        %v397 = vadd.s32 %v390, 56
        %v398 = vadd.s32 %v390, 64
        %v399 = vadd.s32 %v390, 72
        %v400 = vadd.s32 %v390, 80
        %v401 = vadd.s32 %v390, 88
        %v402 = vadd.s32 %v390, 96
        %v403 = vadd.s32 %v390, 104
        %v404 = vadd.s32 %v390, 112
        %v405 = vadd.s32 %v390, 120
        %v406 = vstv %s388
        %v407 = vadd.s32 %v406, %v390
        %v408 = vadd.s32 %v406, %v391
        %v409 = vadd.s32 %v406, %v392
        %v410 = vadd.s32 %v406, %v393
        %v411 = vadd.s32 %v406, %v394
        %v412 = vadd.s32 %v406, %v395
        %v413 = vadd.s32 %v406, %v396
        %v414 = vadd.s32 %v406, %v397
        %v415 = vadd.s32 %v406, %v398
        %v416 = vadd.s32 %v406, %v399
        %v417 = vadd.s32 %v406, %v400
        %v418 = vadd.s32 %v406, %v401
        %v419 = vadd.s32 %v406, %v402
        %v420 = vadd.s32 %v406, %v403
        %v421 = vadd.s32 %v406, %v404
        %v422 = vadd.s32 %v406, %v405
        %vm423 = vcmp.lt.s32.totalorder %v407, 16
        %vm424 = vcmp.lt.s32.totalorder %v408, 16
        %vm425 = vcmp.lt.s32.totalorder %v409, 16
        %vm426 = vcmp.lt.s32.totalorder %v410, 16
        %vm427 = vcmp.lt.s32.totalorder %v411, 16
        %vm428 = vcmp.lt.s32.totalorder %v412, 16
        %vm429 = vcmp.lt.s32.totalorder %v413, 16
        %vm430 = vcmp.lt.s32.totalorder %v414, 16
        %vm431 = vcmp.lt.s32.totalorder %v415, 16
        %vm432 = vcmp.lt.s32.totalorder %v416, 16
        %vm433 = vcmp.lt.s32.totalorder %v417, 16
        %vm434 = vcmp.lt.s32.totalorder %v418, 16
        %vm435 = vcmp.lt.s32.totalorder %v419, 16
        %vm436 = vcmp.lt.s32.totalorder %v420, 16
        %vm437 = vcmp.lt.s32.totalorder %v421, 16
        %vm438 = vcmp.lt.s32.totalorder %v422, 16
        %v439 = vsel %vm423, 1, 0
        %v440 = vsel %vm424, 1, 0
        %v441 = vsel %vm425, 1, 0
        %v442 = vsel %vm426, 1, 0
        %v443 = vsel %vm427, 1, 0
        %v444 = vsel %vm428, 1, 0
        %v445 = vsel %vm429, 1, 0
        %v446 = vsel %vm430, 1, 0
        %v447 = vsel %vm431, 1, 0
        %v448 = vsel %vm432, 1, 0
        %v449 = vsel %vm433, 1, 0
        %v450 = vsel %vm434, 1, 0
        %v451 = vsel %vm435, 1, 0
        %v452 = vsel %vm436, 1, 0
        %v453 = vsel %vm437, 1, 0
        %v454 = vsel %vm438, 1, 0
        %vm455 = vcmp.eq.s32.totalorder %v439, 1
        %vm456 = vcmp.eq.s32.totalorder %v440, 1
        %vm457 = vcmp.eq.s32.totalorder %v441, 1
        %vm458 = vcmp.eq.s32.totalorder %v442, 1
        %vm459 = vcmp.eq.s32.totalorder %v443, 1
        %vm460 = vcmp.eq.s32.totalorder %v444, 1
        %vm461 = vcmp.eq.s32.totalorder %v445, 1
        %vm462 = vcmp.eq.s32.totalorder %v446, 1
        %vm463 = vcmp.eq.s32.totalorder %v447, 1
        %vm464 = vcmp.eq.s32.totalorder %v448, 1
        %vm465 = vcmp.eq.s32.totalorder %v449, 1
        %vm466 = vcmp.eq.s32.totalorder %v450, 1
        %vm467 = vcmp.eq.s32.totalorder %v451, 1
        %vm468 = vcmp.eq.s32.totalorder %v452, 1
        %vm469 = vcmp.eq.s32.totalorder %v453, 1
        %vm470 = vcmp.eq.s32.totalorder %v454, 1
        %vm471 = vmpackc.low %vm455, %vm455
        %vm472 = vmpackc.low %vm456, %vm456
        %vm473 = vmpackc.low %vm457, %vm457
        %vm474 = vmpackc.low %vm458, %vm458
        %vm475 = vmpackc.low %vm459, %vm459
        %vm476 = vmpackc.low %vm460, %vm460
        %vm477 = vmpackc.low %vm461, %vm461
        %vm478 = vmpackc.low %vm462, %vm462
        %vm479 = vmpackc.low %vm463, %vm463
        %vm480 = vmpackc.low %vm464, %vm464
        %vm481 = vmpackc.low %vm465, %vm465
        %vm482 = vmpackc.low %vm466, %vm466
        %vm483 = vmpackc.low %vm467, %vm467
        %vm484 = vmpackc.low %vm468, %vm468
        %vm485 = vmpackc.low %vm469, %vm469
        %vm486 = vmpackc.low %vm470, %vm470
        %v487 = vsel %vm471, %v371, 0
        %v488 = vsel %vm472, %v372, 0
        %v489 = vsel %vm473, %v373, 0
        %v490 = vsel %vm474, %v374, 0
        %v491 = vsel %vm475, %v375, 0
        %v492 = vsel %vm476, %v376, 0
        %v493 = vsel %vm477, %v377, 0
        %v494 = vsel %vm478, %v378, 0
        %v495 = vsel %vm479, %v379, 0
        %v496 = vsel %vm480, %v380, 0
        %v497 = vsel %vm481, %v381, 0
        %v498 = vsel %vm482, %v382, 0
        %v499 = vsel %vm483, %v383, 0
        %v500 = vsel %vm484, %v384, 0
        %v501 = vsel %vm485, %v385, 0
        %v502 = vsel %vm486, %v386, 0
        %v503 = vld [vmem:[%s2] sm:$0x3]
        %v520 = vunpack.c.l.b16 %v487
        %v521 = vunpack.c.l.b16 %v488
        %v522 = vunpack.c.l.b16 %v489
        %v523 = vunpack.c.l.b16 %v490
        %v524 = vunpack.c.l.b16 %v491
        %v525 = vunpack.c.l.b16 %v492
        %v526 = vunpack.c.l.b16 %v493
        %v527 = vunpack.c.l.b16 %v494
        %v528 = vunpack.c.l.b16 %v495
        %v529 = vunpack.c.l.b16 %v496
        %v530 = vunpack.c.l.b16 %v497
        %v531 = vunpack.c.l.b16 %v498
        %v532 = vunpack.c.l.b16 %v499
        %v533 = vunpack.c.l.b16 %v500
        %v534 = vunpack.c.l.b16 %v501
        %v535 = vunpack.c.l.b16 %v502
        %v536 = vpack.c.b16 %v521, %v520
        %v537 = vpack.c.b16 %v523, %v522
        %v538 = vpack.c.b16 %v525, %v524
        %v539 = vpack.c.b16 %v527, %v526
        %v540 = vpack.c.b16 %v529, %v528
        %v541 = vpack.c.b16 %v531, %v530
        %v542 = vpack.c.b16 %v533, %v532
        %v543 = vpack.c.b16 %v535, %v534
        %vm544 = vcmask 23552
        %v546 = vsel %vm544, %v536, 0
        %v549 = vsel %vm544, %v537, 0
        %v552 = vsel %vm544, %v538, 0
        %v555 = vsel %vm544, %v539, 0
        %v558 = vsel %vm544, %v540, 0
        %v561 = vsel %vm544, %v541, 0
        %v564 = vsel %vm544, %v542, 0
        %v567 = vsel %vm544, %v543, 0
        %vm569 = vcmask 1040384
        %vm570 = vcmask 1041408
        %v571 = vsel %vm569, 4294967295, 65535
        %v572 = vsel %vm570, %v571, 0
        %v574 = vand.u32 %v503, %v572
        %576 = vmatprep.subr.bf16.mxu0 0
        %577 = vmatpush1.bf16.msra.mxu0 0
        %578 = vmatprep.subr.bf16.mxu0 0
        %579 = vmatpush1.bf16.msra.mxu0 0
        %580 = vmatprep.subr.bf16.mxu0 0
        %581 = vmatpush1.bf16.msra.mxu0 0
        %582 = vmatprep.subr.bf16.mxu0 0
        %583 = vmatpush1.bf16.msra.mxu0 0
        %584 = vmatprep.subr.bf16.mxu0 0
        %585 = vmatpush1.bf16.msra.mxu0 0
        %586 = vmatprep.subr.bf16.mxu0 0
        %587 = vmatpush1.bf16.msra.mxu0 0
        %588 = vmatprep.subr.bf16.mxu0 0
        %589 = vmatpush1.bf16.msra.mxu0 0
        %590 = vmatprep.subr.bf16.mxu0 0
        %591 = vmatpush1.bf16.msra.mxu0 %v574
        %592 = vmatprep.subr.bf16.mxu0 0
        %593 = vmatpush2.bf16.msra.mxu0 0
        %594 = vmatprep.subr.bf16.mxu0 0
        %595 = vmatpush2.bf16.msra.mxu0 0
        %596 = vmatprep.subr.bf16.mxu0 0
        %597 = vmatpush2.bf16.msra.mxu0 0
        %598 = vmatprep.subr.bf16.mxu0 0
        %599 = vmatpush2.bf16.msra.mxu0 0
        %600 = vmatprep.subr.bf16.mxu0 0
        %601 = vmatpush2.bf16.msra.mxu0 0
        %602 = vmatprep.subr.bf16.mxu0 0
        %603 = vmatpush2.bf16.msra.mxu0 0
        %604 = vmatprep.subr.bf16.mxu0 0
        %605 = vmatpush2.bf16.msra.mxu0 0
        %606 = vmatprep.subr.bf16.mxu0 0
        %607 = vmatpush2.bf16.msra.mxu0 0
        %608 = vmatprep.mubr.bf16.mxu0 0
        %609 = vmatmul.mubr.bf16.gmra.mxu0 %v546
        %v610 = vpop.f32.mrf.mxu0
        %v611 = vadd.f32 0.0, %v610
        %v612 = vpop.f32.mrf.mxu0
        %v613 = vpop.f32.mrf.mxu0
        %v614 = vadd.f32 0.0, %v613
        %v615 = vpop.f32.mrf.mxu0
        %616 = vmatprep.mubr.bf16.mxu0 0
        %617 = vmatmul.mubr.bf16.gmra.mxu0 %v549
        %v618 = vpop.f32.mrf.mxu0
        %v619 = vadd.f32 0.0, %v618
        %v620 = vpop.f32.mrf.mxu0
        %v621 = vpop.f32.mrf.mxu0
        %v622 = vadd.f32 0.0, %v621
        %v623 = vpop.f32.mrf.mxu0
        %624 = vmatprep.mubr.bf16.mxu0 0
        %625 = vmatmul.mubr.bf16.gmra.mxu0 %v552
        %v626 = vpop.f32.mrf.mxu0
        %v627 = vadd.f32 0.0, %v626
        %v628 = vpop.f32.mrf.mxu0
        %v629 = vpop.f32.mrf.mxu0
        %v630 = vadd.f32 0.0, %v629
        %v631 = vpop.f32.mrf.mxu0
        %632 = vmatprep.mubr.bf16.mxu0 0
        %633 = vmatmul.mubr.bf16.gmra.mxu0 %v555
        %v634 = vpop.f32.mrf.mxu0
        %v635 = vadd.f32 0.0, %v634
        %v636 = vpop.f32.mrf.mxu0
        %v637 = vpop.f32.mrf.mxu0
        %v638 = vadd.f32 0.0, %v637
        %v639 = vpop.f32.mrf.mxu0
        %640 = vmatprep.mubr.bf16.mxu0 0
        %641 = vmatmul.mubr.bf16.gmra.mxu0 %v558
        %v642 = vpop.f32.mrf.mxu0
        %v643 = vadd.f32 0.0, %v642
        %v644 = vpop.f32.mrf.mxu0
        %v645 = vpop.f32.mrf.mxu0
        %v646 = vadd.f32 0.0, %v645
        %v647 = vpop.f32.mrf.mxu0
        %648 = vmatprep.mubr.bf16.mxu0 0
        %649 = vmatmul.mubr.bf16.gmra.mxu0 %v561
        %v650 = vpop.f32.mrf.mxu0
        %v651 = vadd.f32 0.0, %v650
        %v652 = vpop.f32.mrf.mxu0
        %v653 = vpop.f32.mrf.mxu0
        %v654 = vadd.f32 0.0, %v653
        %v655 = vpop.f32.mrf.mxu0
        %656 = vmatprep.mubr.bf16.mxu0 0
        %657 = vmatmul.mubr.bf16.gmra.mxu0 %v564
        %v658 = vpop.f32.mrf.mxu0
        %v659 = vadd.f32 0.0, %v658
        %v660 = vpop.f32.mrf.mxu0
        %v661 = vpop.f32.mrf.mxu0
        %v662 = vadd.f32 0.0, %v661
        %v663 = vpop.f32.mrf.mxu0
        %664 = vmatprep.mubr.bf16.mxu0 0
        %665 = vmatmul.mubr.bf16.gmra.mxu0 %v567
        %v666 = vpop.f32.mrf.mxu0
        %v667 = vadd.f32 0.0, %v666
        %v668 = vpop.f32.mrf.mxu0
        %v669 = vpop.f32.mrf.mxu0
        %v670 = vadd.f32 0.0, %v669
        %v671 = vpop.f32.mrf.mxu0
        %672 = vdwg.mxu0
        %v673 = vpack.c.bf16 %v614, %v611
        %v674 = vpack.c.bf16 %v622, %v619
        %v675 = vpack.c.bf16 %v630, %v627
        %v676 = vpack.c.bf16 %v638, %v635
        %v677 = vpack.c.bf16 %v646, %v643
        %v678 = vpack.c.bf16 %v654, %v651
        %v679 = vpack.c.bf16 %v662, %v659
        %v680 = vpack.c.bf16 %v670, %v667
        %v689 = vunpack.c.l.b16 %v673
        %v690 = vunpack.c.h.b16 %v673
        %v691 = vunpack.c.l.b16 %v674
        %v692 = vunpack.c.h.b16 %v674
        %v693 = vunpack.c.l.b16 %v675
        %v694 = vunpack.c.h.b16 %v675
        %v695 = vunpack.c.l.b16 %v676
        %v696 = vunpack.c.h.b16 %v676
        %v697 = vunpack.c.l.b16 %v677
        %v698 = vunpack.c.h.b16 %v677
        %v699 = vunpack.c.l.b16 %v678
        %v700 = vunpack.c.h.b16 %v678
        %v701 = vunpack.c.l.b16 %v679
        %v702 = vunpack.c.h.b16 %v679
        %v703 = vunpack.c.l.b16 %v680
        %v704 = vunpack.c.h.b16 %v680
        %v705 = vpack.c.b16 %v689, %v689
        %v706 = vpack.c.b16 %v690, %v690
        %v707 = vpack.c.b16 %v691, %v691
        %v708 = vpack.c.b16 %v692, %v692
        %v709 = vpack.c.b16 %v693, %v693
        %v710 = vpack.c.b16 %v694, %v694
        %v711 = vpack.c.b16 %v695, %v695
        %v712 = vpack.c.b16 %v696, %v696
        %v713 = vpack.c.b16 %v697, %v697
        %v714 = vpack.c.b16 %v698, %v698
        %v715 = vpack.c.b16 %v699, %v699
        %v716 = vpack.c.b16 %v700, %v700
        %v717 = vpack.c.b16 %v701, %v701
        %v718 = vpack.c.b16 %v702, %v702
        %v719 = vpack.c.b16 %v703, %v703
        %v720 = vpack.c.b16 %v704, %v704
        %vm737 = vcmask 519168
        %738 = vst.msk [vmem:[%s303] sm:$0xf] %vm737, %v705
        %739 = vst.msk [vmem:[%s303 + $0x4] sm:$0xf] %vm737, %v706
        %740 = vst.msk [vmem:[%s303 + $0x8] sm:$0xf] %vm737, %v707
        %741 = vst.msk [vmem:[%s303 + $0xc] sm:$0xf] %vm737, %v708
        %742 = vst.msk [vmem:[%s303 + $0x10] sm:$0xf] %vm737, %v709
        %743 = vst.msk [vmem:[%s303 + $0x14] sm:$0xf] %vm737, %v710
        %744 = vst.msk [vmem:[%s303 + $0x18] sm:$0xf] %vm737, %v711
        %745 = vst.msk [vmem:[%s303 + $0x1c] sm:$0xf] %vm737, %v712
        %746 = vst.msk [vmem:[%s303 + $0x20] sm:$0xf] %vm737, %v713
        %747 = vst.msk [vmem:[%s303 + $0x24] sm:$0xf] %vm737, %v714
        %748 = vst.msk [vmem:[%s303 + $0x28] sm:$0xf] %vm737, %v715
        %749 = vst.msk [vmem:[%s303 + $0x2c] sm:$0xf] %vm737, %v716
        %750 = vst.msk [vmem:[%s303 + $0x30] sm:$0xf] %vm737, %v717
        %751 = vst.msk [vmem:[%s303 + $0x34] sm:$0xf] %vm737, %v718
        %752 = vst.msk [vmem:[%s303 + $0x38] sm:$0xf] %vm737, %v719
        %753 = vst.msk [vmem:[%s303 + $0x3c] sm:$0xf] %vm737, %v720
        %v754 = vld [vmem:[%s275] sm:$0x1]
        %vm755 = vcmask 523264
        %v756 = vsel %vm755, %v611, 0.0
        %v757 = vsel %vm755, %v614, 0.0
        %v758 = vadd.f32 %v756, %v757
        %v759 = vsel %vm755, %v619, 0.0
        %v760 = vadd.f32 %v758, %v759
        %v761 = vsel %vm755, %v622, 0.0
        %v762 = vadd.f32 %v760, %v761
        %v763 = vsel %vm755, %v627, 0.0
        %v764 = vadd.f32 %v762, %v763
        %v765 = vsel %vm755, %v630, 0.0
        %v766 = vadd.f32 %v764, %v765
        %v767 = vsel %vm755, %v635, 0.0
        %v768 = vadd.f32 %v766, %v767
        %v769 = vsel %vm755, %v638, 0.0
        %v770 = vadd.f32 %v768, %v769
        %v771 = vsel %vm755, %v643, 0.0
        %v772 = vadd.f32 %v770, %v771
        %v773 = vsel %vm755, %v646, 0.0
        %v774 = vadd.f32 %v772, %v773
        %v775 = vsel %vm755, %v651, 0.0
        %v776 = vadd.f32 %v774, %v775
        %v777 = vsel %vm755, %v654, 0.0
        %v778 = vadd.f32 %v776, %v777
        %v779 = vsel %vm755, %v659, 0.0
        %v780 = vadd.f32 %v778, %v779
        %v781 = vsel %vm755, %v662, 0.0
        %v782 = vadd.f32 %v780, %v781
        %v783 = vsel %vm755, %v667, 0.0
        %v784 = vadd.f32 %v782, %v783
        %v785 = vsel %vm755, %v670, 0.0
        %v786 = vadd.f32 %v784, %v785
        %v787 = vrot.slane %v786, 4
        %v788 = vadd.f32 %v786, %v787
        %v789 = vrot.slane %v788, 2
        %v790 = vadd.f32 %v788, %v789
        %v791 = vrot.slane %v790, 1
        %v792 = vadd.f32 %v790, %v791
        %v793 = vadd.f32 %v754, %v792
        %vm794 = vcmask 516096
        %795 = vst.msk [vmem:[%s275] sm:$0x1] %vm794, %v793
        %v796 = vld [vmem:[%s281] sm:$0x1]
        %v797 = vmul.f32 %v611, %v611
        %v798 = vmul.f32 %v614, %v614
        %v799 = vmul.f32 %v619, %v619
        %v800 = vmul.f32 %v622, %v622
        %v801 = vmul.f32 %v627, %v627
        %v802 = vmul.f32 %v630, %v630
        %v803 = vmul.f32 %v635, %v635
        %v804 = vmul.f32 %v638, %v638
        %v805 = vmul.f32 %v643, %v643
        %v806 = vmul.f32 %v646, %v646
        %v807 = vmul.f32 %v651, %v651
        %v808 = vmul.f32 %v654, %v654
        %v809 = vmul.f32 %v659, %v659
        %v810 = vmul.f32 %v662, %v662
        %v811 = vmul.f32 %v667, %v667
        %v812 = vmul.f32 %v670, %v670
        %v813 = vsel %vm755, %v797, 0.0
        %v814 = vsel %vm755, %v798, 0.0
        %v815 = vadd.f32 %v813, %v814
        %v816 = vsel %vm755, %v799, 0.0
        %v817 = vadd.f32 %v815, %v816
        %v818 = vsel %vm755, %v800, 0.0
        %v819 = vadd.f32 %v817, %v818
        %v820 = vsel %vm755, %v801, 0.0
        %v821 = vadd.f32 %v819, %v820
        %v822 = vsel %vm755, %v802, 0.0
        %v823 = vadd.f32 %v821, %v822
        %v824 = vsel %vm755, %v803, 0.0
        %v825 = vadd.f32 %v823, %v824
        %v826 = vsel %vm755, %v804, 0.0
        %v827 = vadd.f32 %v825, %v826
        %v828 = vsel %vm755, %v805, 0.0
        %v829 = vadd.f32 %v827, %v828
        %v830 = vsel %vm755, %v806, 0.0
        %v831 = vadd.f32 %v829, %v830
        %v832 = vsel %vm755, %v807, 0.0
        %v833 = vadd.f32 %v831, %v832
        %v834 = vsel %vm755, %v808, 0.0
        %v835 = vadd.f32 %v833, %v834
        %v836 = vsel %vm755, %v809, 0.0
        %v837 = vadd.f32 %v835, %v836
        %v838 = vsel %vm755, %v810, 0.0
        %v839 = vadd.f32 %v837, %v838
        %v840 = vsel %vm755, %v811, 0.0
        %v841 = vadd.f32 %v839, %v840
        %v842 = vsel %vm755, %v812, 0.0
        %v843 = vadd.f32 %v841, %v842
        %v844 = vrot.slane %v843, 4
        %v845 = vadd.f32 %v843, %v844
        %v846 = vrot.slane %v845, 2
        %v847 = vadd.f32 %v845, %v846
        %v848 = vrot.slane %v847, 1
        %v849 = vadd.f32 %v847, %v848
        %v850 = vadd.f32 %v796, %v849
        %851 = vst.msk [vmem:[%s281] sm:$0x1] %vm794, %v850
        %s852 = sadd.s32 %s29, %s30
        %s853 = smul.u32 16, %s852
        %p854 = scmp.lt.s32.totalorder %s28, 1
        %s855 = scalar_select %p854, %s28, 1
        %p856 = scmp.lt.s32.totalorder %s853, 15
        %s857 = scalar_select %p856, %s853, 15
        %s858 = smul.addr %s855, 16
        %s859 = sadd.s32 %s857, %s858
        %s860 = smul.addr %s859, 4
        %s861 = scalar_lea.vmem %s3, %s860
        %s862 = sand.u32 %s154, 1
        %s863 = scalar_lea.sflag [#allocation3], %s862
        %s864 = sand.u32 %s154, 1
        %s865 = scalar_lea.vmem [#allocation2], %s864
        %s866 = sand.u32 %s182, 1
        %s867 = scalar_lea.sflag [#allocation5], %s866
        %s868 = sand.u32 %s182, 1
        %s869 = scalar_lea.vmem [#allocation4], %s868
        // Predicated region
        $region37: #{tpu_custom_call.1} parent=31 // pred_check
          %p870 = pneg %p136
        $region38: #{tpu_custom_call.1} parent=31 // pred_check_branch
          %872 = sbr.rel (%p870) target = $region40
        $region39: #{tpu_custom_call.1} parent=31 // pred_region
          %s873 = sadd.s32 %s29, %s30
          %s874 = smul.u32 16, %s873
        $region40: #{tpu_custom_call.1} parent=31 // pred_fallthru
          _
        // Predicated region
        $region41: #{tpu_custom_call.1} parent=31 // pred_check
          %p875 = pneg %p164
        $region42: #{tpu_custom_call.1} parent=31 // pred_check_branch
          %877 = sbr.rel (%p875) target = $region44
        $region43: #{tpu_custom_call.1} parent=31 // pred_region
          %s878 = sadd.s32 %s28, %s29
          %s880 = ssub.s32 16, 16
          %881 = vsyncadd %s863, %s880
          %s882 = smul.addr %s878, 16
          %s883 = scalar_lea.hbm %s4, %s882
          %s885 = sshll.u32 %s865, 4
          %s886 = int_to_ptr.vmem [resolvable:$true] %s885
          %888 = dma.vmem_to_hbm [thread:$0]  %s886, 16, %s883, %s863
        $region44: #{tpu_custom_call.1} parent=31 // pred_fallthru
          _
        // Predicated region
        $region45: #{tpu_custom_call.1} parent=31 // pred_check
          %p889 = pneg %p192
        $region46: #{tpu_custom_call.1} parent=31 // pred_check_branch
          %891 = sbr.rel (%p889) target = $region48
        $region47: #{tpu_custom_call.1} parent=31 // pred_region
          %s892 = sadd.s32 %s28, %s29
          %s894 = ssub.s32 16, 16
          %895 = vsyncadd %s867, %s894
          %s896 = smul.addr %s892, 16
          %s897 = scalar_lea.hbm %s5, %s896
          %s899 = sshll.u32 %s869, 4
          %s900 = int_to_ptr.vmem [resolvable:$true] %s899
          %902 = dma.vmem_to_hbm [thread:$0]  %s900, 16, %s897, %s867
        $region48: #{tpu_custom_call.1} parent=31 // pred_fallthru
          _
      $region32: #{tpu_custom_call.1} parent=5 // pred_fallthru
        _
      %p903 = scmp.le.s32.totalorder 2, %s18
      // Predicated region
      $region49: #{tpu_custom_call.1} parent=5 // pred_check
        %p904 = pneg %p903
      $region50: #{tpu_custom_call.1} parent=5 // pred_check_branch
        %906 = sbr.rel (%p904) target = $region52
      $region51: #{tpu_custom_call.1} parent=5 // pred_region
        %s907 = ssub.s32 %s18, 2
        // Predicated region
        $region53: #{tpu_custom_call.1} parent=51 // pred_check
          %p908 = pneg %p142
        $region54: #{tpu_custom_call.1} parent=51 // pred_check_branch
          %910 = sbr.rel (%p908) target = $region56
        $region55: #{tpu_custom_call.1} parent=51 // pred_region
          %s911 = sadd.s32 %s32, %s33
          %s912 = smul.u32 16, %s911
          %p913 = scmp.lt.s32.totalorder %s31, 1
          %s914 = scalar_select %p913, %s31, 1
          %p915 = scmp.lt.s32.totalorder %s912, 15
          %s916 = scalar_select %p915, %s912, 15
          %s917 = smul.addr %s914, 16
          %s918 = sadd.s32 %s916, %s917
          %s919 = smul.addr %s918, 4
          %s920 = scalar_lea.vmem %s3, %s919
        $region56: #{tpu_custom_call.1} parent=51 // pred_fallthru
          _
        // Predicated region
        $region57: #{tpu_custom_call.1} parent=51 // pred_check
          %p921 = pneg %p170
        $region58: #{tpu_custom_call.1} parent=51 // pred_check_branch
          %923 = sbr.rel (%p921) target = $region60
        $region59: #{tpu_custom_call.1} parent=51 // pred_region
          %s924 = sand.u32 %s155, 1
          %s925 = scalar_lea.sflag [#allocation3], %s924
          %s926 = sand.u32 %s155, 1
          %s927 = scalar_lea.vmem [#allocation2], %s926
          %928 = dma.done %s925, 16
        $region60: #{tpu_custom_call.1} parent=51 // pred_fallthru
          _
        // Predicated region
        $region61: #{tpu_custom_call.1} parent=51 // pred_check
          %p929 = pneg %p198
        $region62: #{tpu_custom_call.1} parent=51 // pred_check_branch
          %931 = sbr.rel (%p929) target = $region64
        $region63: #{tpu_custom_call.1} parent=51 // pred_region
          %s932 = sand.u32 %s183, 1
          %s933 = scalar_lea.sflag [#allocation5], %s932
          %s934 = sand.u32 %s183, 1
          %s935 = scalar_lea.vmem [#allocation4], %s934
          %936 = dma.done %s933, 16
        $region64: #{tpu_custom_call.1} parent=51 // pred_fallthru
          _
      $region52: #{tpu_custom_call.1} parent=5 // pred_fallthru
        _
    $region6: #{tpu_custom_call.1} parent=1 // loop_footer
      %s22 = sadd.s32 1, %s18
    $region7: #{tpu_custom_call.1} parent=1 // loop_footer_branch
      %17 = sbr.rel target = $region3
    $region8: #{tpu_custom_call.1} parent=1 // loop_exit
      _
    %937 = vsyncpa [#allocation3], 1
    %s938 = scalar_lea.sflag [#allocation3], 1
    %939 = vsyncpa %s938, 1
    %940 = vsyncpa [#allocation5], 1
    %s941 = scalar_lea.sflag [#allocation5], 1
    %942 = vsyncpa %s941, 1

</llo_original>
